<compile_context>
chip_gen: v6e
topology: v6e:2x2x1
jax: 0.10.0
libtpu: 0.0.40
codegen_flags: <defaults>
</compile_context>

<pallas_src>
import functools

import jax
import jax.numpy as jnp
import numpy as np
from jax.experimental import pallas as pl
from jax.experimental.pallas import tpu as pltpu


def _mlp_summarize_kernel(tok_ref, w1_ref, b1_ref, w2_ref, out_ref):
    # tok_ref : [TB, N, E]   (TB batch elements per grid step)
    # w1_ref  : [E, H]
    # b1_ref  : [1, H]
    # w2_ref  : [1, H]       (already scaled by 1/temperature; b2 dropped)
    # out_ref : [TB, 1, E]
    tb, n, e = tok_ref.shape
    hdim = w1_ref.shape[1]

    tokens = tok_ref[...].astype(jnp.float32)                      # [TB, N, E]

    # ---- (1) Hidden layer: one big MXU matmul over all TB*N tokens ----
    tok2d = tokens.reshape(tb * n, e)                              # leading-dim merge
    h = jnp.dot(tok2d, w1_ref[...],
                preferred_element_type=jnp.float32)                # [TB*N, H]
    h = jnp.maximum(h + b1_ref[...], 0.0)                          # ReLU
    h3 = h.reshape(tb, n, hdim)                                    # [TB, N, H]

    # ---- (2) Scorer head: q == 1 batched MXU contraction, token axis on
    #          lanes (lane-dense softmax).  Temperature is pre-folded into
    #          W2 and b2 is dropped (softmax shift invariance). ----
    w2b = jnp.broadcast_to(w2_ref[...].reshape(1, 1, hdim), (tb, 1, hdim))
    logits = jnp.einsum('bqh,bnh->bqn', w2b, h3,
                        preferred_element_type=jnp.float32)        # [TB, 1, N]

    # ---- (3) softmax over the token (lane) axis ----
    m = jnp.max(logits, axis=-1, keepdims=True)                    # [TB, 1, 1]
    p = jnp.exp(logits - m)                                        # [TB, 1, N]
    weights = p / jnp.sum(p, axis=-1, keepdims=True)               # [TB, 1, N]

    # ---- (4) weighted token sum as a batched MXU contraction over N ----
    acc = jnp.einsum('bqn,bne->bqe', weights, tokens,
                     preferred_element_type=jnp.float32)           # [TB, 1, E]

    out_ref[...] = acc.astype(out_ref.dtype)


def mlp_summarizer_forward(tokens, w1, b1, w2, b2=None, *,
                           temperature=1.0, k=1, batch_block=8):
    """Pallas implementation of MLPSummarizer.forward (k == 1 path)."""
    B, N, E = tokens.shape
    H = w1.shape[1]

    # Degenerate branches (pure glue, no compute worth a kernel).
    if N <= k:
        if N < k:
            pad = jnp.zeros((B, k - N, E), dtype=tokens.dtype)
            return jnp.concatenate([tokens, pad], axis=1)
        return tokens
    if k != 1:
        # TODO(synk): k > 1 per-k learned-projection path not implemented.
        raise NotImplementedError("k > 1 path not implemented in the kernel")

    itemsize = jnp.dtype(tokens.dtype).itemsize

    # Fold 1/temperature into W2; drop b2 (adding a constant to every logit
    # is a softmax no-op).
    inv_temp = 1.0 / float(temperature)
    w1_m = w1.astype(jnp.float32)
    b1_row = b1.reshape(1, H).astype(jnp.float32)
    w2_row = w2.reshape(1, H).astype(jnp.float32) * jnp.float32(inv_temp)

    # ---- batch tiling: TB batch elements per grid step ----
    TB = batch_block if B >= batch_block else B
    # Keep the double-buffered tokens tile well inside VMEM (v7x has 64 MiB).
    while TB > 1 and 2 * TB * N * E * itemsize > 24 * 1024 * 1024:
        TB //= 2
    B_pad = pl.cdiv(B, TB) * TB
    tok_in = tokens
    if B_pad != B:
        tok_in = jnp.concatenate(
            [tokens, jnp.zeros((B_pad - B, N, E), dtype=tokens.dtype)], axis=0)

    grid = (B_pad // TB,)

    # VMEM budget: raise past the 16/32 MiB scoped defaults when needed, but
    # stay clearly under v7x's 64 MiB physical VMEM.
    need = (2 * TB * N * E * itemsize          # double-buffered tokens
            + (E * H + 2 * H) * 4              # weights
            + 2 * TB * E * itemsize            # double-buffered output
            + (2 << 20))                       # scratch headroom
    vmem_limit = int(min(max(32 * 1024 * 1024, 2 * need), 56 * 1024 * 1024))

    cost = pl.CostEstimate(
        flops=2 * B_pad * N * E * H + 2 * B_pad * N * H + 2 * B_pad * N * E,
        transcendentals=B_pad * N,
        bytes_accessed=(B_pad * N * E * itemsize + B_pad * E * itemsize
                        + (E * H + 2 * H) * 4),
    )

    out = pl.pallas_call(
        _mlp_summarize_kernel,
        out_shape=jax.ShapeDtypeStruct((B_pad, 1, E), tokens.dtype),
        grid_spec=pltpu.PrefetchScalarGridSpec(
            num_scalar_prefetch=0,
            grid=grid,
            in_specs=[
                pl.BlockSpec((TB, N, E), lambda b: (b, 0, 0)),   # tokens
                pl.BlockSpec((E, H), lambda b: (0, 0)),          # W1
                pl.BlockSpec((1, H), lambda b: (0, 0)),          # b1
                pl.BlockSpec((1, H), lambda b: (0, 0)),          # W2 / T
            ],
            out_specs=pl.BlockSpec((TB, 1, E), lambda b: (b, 0, 0)),
        ),
        compiler_params=pltpu.CompilerParams(
            dimension_semantics=("parallel",),
            vmem_limit_bytes=vmem_limit),
        cost_estimate=cost,
    )(tok_in, w1_m, b1_row, w2_row)

    return out[:B]


def _reference_forward(tokens, w1, b1, w2, b2, temperature=1.0):
    h = jnp.maximum(tokens @ w1 + b1, 0.0)
    logits = (h @ w2 + b2) / temperature
    weights = jax.nn.softmax(logits, axis=1)
    return jnp.sum(tokens * weights, axis=1, keepdims=True)


def _make_params(key, E, H):
    k_w1, k_b1, k_w2, k_b2 = jax.random.split(key, 4)
    lim1 = 1.0 / np.sqrt(E)
    w1 = jax.random.uniform(k_w1, (E, H), jnp.float32, -lim1, lim1)
    b1 = jax.random.uniform(k_b1, (H,), jnp.float32, -lim1, lim1)
    lim2 = 1.0 / np.sqrt(H)
    w2 = jax.random.uniform(k_w2, (H, 1), jnp.float32, -lim2, lim2)
    b2 = jax.random.uniform(k_b2, (1,), jnp.float32, -lim2, lim2)
    return w1, b1, w2, b2


if __name__ == "__main__":
    key = jax.random.PRNGKey(0)
    k_tok1, k_tok2, k_par = jax.random.split(key, 3)

    # Case 1: small shapes (batch=2, num_tokens=8, embedding_dim=32, hidden=32).
    B, N, E, H = 2, 8, 32, 32
    w1, b1, w2, b2 = _make_params(k_par, E, H)
    tokens = jax.random.normal(k_tok1, (B, N, E), dtype=jnp.float32)

    out = mlp_summarizer_forward(tokens, w1, b1, w2, b2,
                                 temperature=1.0, k=1)
    out = jax.block_until_ready(out)
    ref = _reference_forward(tokens, w1, b1, w2, b2, 1.0)
    assert out.shape == (B, 1, E), out.shape
    np.testing.assert_allclose(np.asarray(out), np.asarray(ref),
                               rtol=1e-5, atol=1e-5)

    # Case 2: exercises batch padding (B=10 -> TB=8, padded to 16) and the
    # temperature folding.
    B2, temp = 10, 0.7
    tokens2 = jax.random.normal(k_tok2, (B2, N, E), dtype=jnp.float32)
    out2 = mlp_summarizer_forward(tokens2, w1, b1, w2, b2,
                                  temperature=temp, k=1)
    out2 = jax.block_until_ready(out2)
    ref2 = _reference_forward(tokens2, w1, b1, w2, b2, temp)
    assert out2.shape == (B2, 1, E), out2.shape
    np.testing.assert_allclose(np.asarray(out2), np.asarray(ref2),
                               rtol=1e-5, atol=1e-5)

    print("KERNEL_OK")
</pallas_src>

<mosaic_0001>
module attributes {stable_mosaic.version = 11 : i64} {
  func.func @_mlp_summarize_kernel(%arg0: i32, %arg1: memref<2x8x32xf32, #tpu.memory_space<vmem>>, %arg2: memref<32x32xf32, #tpu.memory_space<vmem>>, %arg3: memref<1x32xf32, #tpu.memory_space<vmem>>, %arg4: memref<1x32xf32, #tpu.memory_space<vmem>>, %arg5: memref<2x1x32xf32, #tpu.memory_space<vmem>>) attributes {dimension_semantics = [#tpu.dimension_semantics<parallel>], iteration_bounds = array<i64: 1>, scalar_prefetch = 0 : i64, scratch_operands = 0 : i64, tpu.core_type = #tpu.core_type<tc>, window_params = [{transform_indices = @transform_0, window_bounds = array<i64: 2, 8, 32>}, {pipeline_mode = #tpu.pipeline_mode<synchronous>, transform_indices = @transform_1, window_bounds = array<i64: 32, 32>}, {pipeline_mode = #tpu.pipeline_mode<synchronous>, transform_indices = @transform_2, window_bounds = array<i64: 1, 32>}, {pipeline_mode = #tpu.pipeline_mode<synchronous>, transform_indices = @transform_3, window_bounds = array<i64: 1, 32>}, {transform_indices = @transform_4, window_bounds = array<i64: 2, 1, 32>}]} {
    %c0 = arith.constant 0 : index
    %c0_0 = arith.constant 0 : index
    %c0_1 = arith.constant 0 : index
    %0 = vector.load %arg1[%c0, %c0_0, %c0_1] : memref<2x8x32xf32, #tpu.memory_space<vmem>>, vector<2x8x32xf32>
    %1 = vector.shape_cast %0 : vector<2x8x32xf32> to vector<16x32xf32>
    %c0_2 = arith.constant 0 : index
    %c0_3 = arith.constant 0 : index
    %2 = vector.load %arg2[%c0_2, %c0_3] : memref<32x32xf32, #tpu.memory_space<vmem>>, vector<32x32xf32>
    %cst = arith.constant dense<0.000000e+00> : vector<16x32xf32>
    %3 = tpu.matmul %1, %2, %cst {dimension_numbers = #tpu.dot_dimension_numbers<[1], [0], [0], [1], [0, 0, 1, 1], [], []>} : vector<16x32xf32>, vector<32x32xf32>, vector<16x32xf32> -> vector<16x32xf32>
    %c0_4 = arith.constant 0 : index
    %c0_5 = arith.constant 0 : index
    %4 = vector.load %arg3[%c0_4, %c0_5] : memref<1x32xf32, #tpu.memory_space<vmem>>, vector<1x32xf32>
    %5 = vector.broadcast %4 : vector<1x32xf32> to vector<16x32xf32>
    %6 = arith.addf %3, %5 : vector<16x32xf32>
    %cst_6 = arith.constant 0.000000e+00 : f32
    %7 = vector.broadcast %cst_6 : f32 to vector<16x32xf32>
    %8 = arith.maximumf %6, %7 : vector<16x32xf32>
    %9 = vector.shape_cast %8 : vector<16x32xf32> to vector<2x8x32xf32>
    %c0_7 = arith.constant 0 : index
    %c0_8 = arith.constant 0 : index
    %10 = vector.load %arg4[%c0_7, %c0_8] : memref<1x32xf32, #tpu.memory_space<vmem>>, vector<1x32xf32>
    %11 = vector.shape_cast %10 : vector<1x32xf32> to vector<1x1x32xf32>
    %12 = vector.shape_cast %11 : vector<1x1x32xf32> to vector<1x1x32xf32>
    %13 = vector.broadcast %12 : vector<1x1x32xf32> to vector<2x1x32xf32>
    "tpu.trace_start"() <{level = 10 : i32, message = "bqh,bnh->bqn"}> : () -> ()
    %cst_9 = arith.constant dense<0.000000e+00> : vector<2x1x8xf32>
    %14 = tpu.matmul %13, %9, %cst_9 {dimension_numbers = #tpu.dot_dimension_numbers<[2], [2], [1], [1], [0, 0, 0, 1, 1, 1], [0], [0]>} : vector<2x1x32xf32>, vector<2x8x32xf32>, vector<2x1x8xf32> -> vector<2x1x8xf32>
    "tpu.trace_stop"() : () -> ()
    %cst_10 = arith.constant dense<0xFF800000> : vector<2x1xf32>
    %15 = vector.multi_reduction <maximumf>, %14, %cst_10 [2] : vector<2x1x8xf32> to vector<2x1xf32>
    %16 = vector.shape_cast %15 : vector<2x1xf32> to vector<2x1x1xf32>
    %17 = vector.broadcast %16 : vector<2x1x1xf32> to vector<2x1x8xf32>
    %18 = arith.subf %14, %17 : vector<2x1x8xf32>
    %19 = math.exp %18 : vector<2x1x8xf32>
    %cst_11 = arith.constant dense<0.000000e+00> : vector<2x1xf32>
    %20 = vector.multi_reduction <add>, %19, %cst_11 [2] : vector<2x1x8xf32> to vector<2x1xf32>
    %21 = vector.shape_cast %20 : vector<2x1xf32> to vector<2x1x1xf32>
    %22 = vector.broadcast %21 : vector<2x1x1xf32> to vector<2x1x8xf32>
    %23 = arith.divf %19, %22 : vector<2x1x8xf32>
    "tpu.trace_start"() <{level = 10 : i32, message = "bqn,bne->bqe"}> : () -> ()
    %cst_12 = arith.constant dense<0.000000e+00> : vector<2x1x32xf32>
    %24 = tpu.matmul %23, %0, %cst_12 {dimension_numbers = #tpu.dot_dimension_numbers<[2], [1], [1], [2], [0, 0, 0, 1, 1, 2], [0], [0]>} : vector<2x1x8xf32>, vector<2x8x32xf32>, vector<2x1x32xf32> -> vector<2x1x32xf32>
    "tpu.trace_stop"() : () -> ()
    %c0_13 = arith.constant 0 : index
    %c0_14 = arith.constant 0 : index
    %c0_15 = arith.constant 0 : index
    %25 = vector.load %arg5[%c0_13, %c0_14, %c0_15] : memref<2x1x32xf32, #tpu.memory_space<vmem>>, vector<2x1x32xf32>
    tpu.vector_store %arg5[%c0_13, %c0_14, %c0_15], %24 {strides = array<i32>} : memref<2x1x32xf32, #tpu.memory_space<vmem>>, vector<2x1x32xf32>,
    return
  }
  func.func @transform_0(%arg0: i32) -> (i32, i32, i32) {
    %c0_i32 = arith.constant 0 : i32
    %c0_i32_0 = arith.constant 0 : i32
    %c0_i32_1 = arith.constant 0 : i32
    return %arg0, %c0_i32, %c0_i32_0 : i32, i32, i32
  }
  func.func @transform_1(%arg0: i32) -> (i32, i32) {
    %c0_i32 = arith.constant 0 : i32
    %c0_i32_0 = arith.constant 0 : i32
    %c0_i32_1 = arith.constant 0 : i32
    return %c0_i32, %c0_i32_0 : i32, i32
  }
  func.func @transform_2(%arg0: i32) -> (i32, i32) {
    %c0_i32 = arith.constant 0 : i32
    %c0_i32_0 = arith.constant 0 : i32
    %c0_i32_1 = arith.constant 0 : i32
    return %c0_i32, %c0_i32_0 : i32, i32
  }
  func.func @transform_3(%arg0: i32) -> (i32, i32) {
    %c0_i32 = arith.constant 0 : i32
    %c0_i32_0 = arith.constant 0 : i32
    %c0_i32_1 = arith.constant 0 : i32
    return %c0_i32, %c0_i32_0 : i32, i32
  }
  func.func @transform_4(%arg0: i32) -> (i32, i32, i32) {
    %c0_i32 = arith.constant 0 : i32
    %c0_i32_0 = arith.constant 0 : i32
    %c0_i32_1 = arith.constant 0 : i32
    return %arg0, %c0_i32, %c0_i32_0 : i32, i32, i32
  }
}

</mosaic_0001>

<llo_original>
// kernel: tpu_custom_call.1
$region0: #{tpu_custom_call.1}
  #allocation0 [shape = 'u32[]', space=smem, size = 0x4, offset = 0x4, fixed_abs, tag = 'smem constant byte address 0x4 - core index']
  #allocation1 [shape = 'u32[144,128]{1,0:T(1,128)}', space=vmem, size = 0x12000, scoped, tag = 'internal scratch']
  %s0 = inlined_call_operand.hbm [shape: f32[2,8,32], index: 0, kind: input, shape index: {}]
  %s1 = inlined_call_operand.hbm [shape: f32[32,32], index: 1, kind: input, shape index: {}]
  %s2 = inlined_call_operand.vmem [shape: f32[1,32], index: 2, kind: input, shape index: {}]
  %s3 = inlined_call_operand.vmem [shape: f32[1,32], index: 3, kind: input, shape index: {}]
  %s4 = inlined_call_operand.hbm [shape: f32[2,1,32], index: 4, kind: output, shape index: {}]
  %s5 = sld [smem:[#allocation0]]
  $region34: #{tpu_custom_call.1} parent=0
    _
  %s7 = ssub.s32 1, %s5
  %s8 = scalar_select 0, %s7, %s5
  $region1: #{tpu_custom_call.1} parent=0
    #allocation2 [shape = 'u8[8192]{0}', space=vmem, size = 0x2000, scoped, tag = 'input window, operand 0, single buffered']
    #allocation3 [shape = 's32[1]{0}', space=sflag, size = 0x4, scoped, tag = 'scoped memory for tpu_custom_call.1']
    #allocation4 [shape = 's32[1]{0}', space=sflag, size = 0x4, scoped, tag = 'scoped memory for tpu_custom_call.1']
    #allocation5 [shape = 'u8[16384]{0}', space=vmem, size = 0x4000, scoped, tag = 'input window, operand 1, single buffered']
    #allocation6 [shape = 's32[1]{0}', space=sflag, size = 0x4, scoped, tag = 'scoped memory for tpu_custom_call.1']
    #allocation7 [shape = 'u8[1024]{0}', space=vmem, size = 0x400, scoped, tag = 'output window, operand 0, single buffered']
    %9 = vsyncpa [#allocation3], 0
    %10 = vsyncpa [#allocation6], 0
    %11 = vsyncpa [#allocation4], 0
    // Predicated region
    $region2: #{tpu_custom_call.1} parent=1 // pred_check
      _
    $region3: #{tpu_custom_call.1} parent=1 // pred_check_branch
      %13 = sbr.rel (0) target = $region5
    $region4: #{tpu_custom_call.1} parent=1 // pred_region
      %s15 = ssub.s32 256, 256
      %16 = vsyncadd [#allocation3], %s15
      %s17 = sshll.u32 [#allocation2], 4
      %s18 = int_to_ptr.vmem [resolvable:$true] %s17
      %23 = dma.hbm_to_vmem [thread:$0]  %s0, 256, %s18, [#allocation3], 128, 128, 8
    $region5: #{tpu_custom_call.1} parent=1 // pred_fallthru
      _
    // Predicated region
    $region6: #{tpu_custom_call.1} parent=1 // pred_check
      _
    $region7: #{tpu_custom_call.1} parent=1 // pred_check_branch
      %25 = sbr.rel (0) target = $region9
    $region8: #{tpu_custom_call.1} parent=1 // pred_region
      %s27 = ssub.s32 512, 512
      %28 = vsyncadd [#allocation6], %s27
      %s29 = sshll.u32 [#allocation5], 4
      %s30 = int_to_ptr.vmem [resolvable:$true] %s29
      %35 = dma.hbm_to_vmem [thread:$0]  %s1, 512, %s30, [#allocation6], 128, 128, 8
    $region9: #{tpu_custom_call.1} parent=1 // pred_fallthru
      _
    // Predicated region
    $region10: #{tpu_custom_call.1} parent=1 // pred_check
      _
    $region11: #{tpu_custom_call.1} parent=1 // pred_check_branch
      %37 = sbr.rel (0) target = $region13
    $region12: #{tpu_custom_call.1} parent=1 // pred_region
      _
    $region13: #{tpu_custom_call.1} parent=1 // pred_fallthru
      _
    // Predicated region
    $region14: #{tpu_custom_call.1} parent=1 // pred_check
      _
    $region15: #{tpu_custom_call.1} parent=1 // pred_check_branch
      %39 = sbr.rel (0) target = $region17
    $region16: #{tpu_custom_call.1} parent=1 // pred_region
      _
    $region17: #{tpu_custom_call.1} parent=1 // pred_fallthru
      _
    // Predicated region
    $region18: #{tpu_custom_call.1} parent=1 // pred_check
      _
    $region19: #{tpu_custom_call.1} parent=1 // pred_check_branch
      %41 = sbr.rel (0) target = $region21
    $region20: #{tpu_custom_call.1} parent=1 // pred_region
      %42 = dma.done [#allocation3], 256
    $region21: #{tpu_custom_call.1} parent=1 // pred_fallthru
      _
    // Predicated region
    $region22: #{tpu_custom_call.1} parent=1 // pred_check
      _
    $region23: #{tpu_custom_call.1} parent=1 // pred_check_branch
      %44 = sbr.rel (0) target = $region25
    $region24: #{tpu_custom_call.1} parent=1 // pred_region
      %45 = dma.done [#allocation6], 512
    $region25: #{tpu_custom_call.1} parent=1 // pred_fallthru
      _
    %v46 = vld [vmem:[#allocation2] sm:$0xff]
    %v47 = vld [vmem:[#allocation2 + $0x8] sm:$0xff]
    %v48 = vld [vmem:[#allocation5] sm:$0xff]
    %v49 = vld [vmem:[#allocation5 + $0x8] sm:$0xff]
    %v50 = vld [vmem:[#allocation5 + $0x10] sm:$0xff]
    %v51 = vld [vmem:[#allocation5 + $0x18] sm:$0xff]
    %v52 = vld [vmem:[%s2] sm:$0x1]
    %v54 = vlaneseq
    %v55 = vshrl.u32 %v54, 7
    %v56 = vsub.s32 0, %v55
    %v57 = vrot.slane %v52, %v56
    %vm59 = vcmask 261120
    %v61 = vsel %vm59, %v46, 0
    %v64 = vsel %vm59, %v47, 0
    %66 = vmatprep.subr.mxu0 0.0
    %67 = vmatpush1.msra.mxu0 0.0
    %68 = vmatprep.subr.mxu0 0.0
    %69 = vmatpush1.msra.mxu0 0.0
    %70 = vmatprep.subr.mxu0 0.0
    %71 = vmatpush1.msra.mxu0 0.0
    %72 = vmatprep.subr.mxu0 0.0
    %73 = vmatpush1.msra.mxu0 0.0
    %74 = vmatprep.subr.mxu0 0.0
    %75 = vmatpush1.msra.mxu0 0.0
    %76 = vmatprep.subr.mxu0 0.0
    %77 = vmatpush1.msra.mxu0 0.0
    %78 = vmatprep.subr.mxu0 0.0
    %79 = vmatpush1.msra.mxu0 0.0
    %80 = vmatprep.subr.mxu0 0.0
    %81 = vmatpush1.msra.mxu0 0.0
    %82 = vmatprep.subr.mxu0 0.0
    %83 = vmatpush1.msra.mxu0 0.0
    %84 = vmatprep.subr.mxu0 0.0
    %85 = vmatpush1.msra.mxu0 0.0
    %86 = vmatprep.subr.mxu0 0.0
    %87 = vmatpush1.msra.mxu0 0.0
    %88 = vmatprep.subr.mxu0 0.0
    %89 = vmatpush1.msra.mxu0 0.0
    %90 = vmatprep.subr.mxu0 0.0
    %91 = vmatpush1.msra.mxu0 %v51
    %92 = vmatprep.subr.mxu0 0.0
    %93 = vmatpush1.msra.mxu0 %v50
    %94 = vmatprep.subr.mxu0 0.0
    %95 = vmatpush1.msra.mxu0 %v49
    %96 = vmatprep.subr.mxu0 0.0
    %97 = vmatpush1.msra.mxu0 %v48
    %98 = vmatprep.subr.mxu0 0.0
    %99 = vmatpush2.msra.mxu0 0.0
    %100 = vmatprep.subr.mxu0 0.0
    %101 = vmatpush2.msra.mxu0 0.0
    %102 = vmatprep.subr.mxu0 0.0
    %103 = vmatpush2.msra.mxu0 0.0
    %104 = vmatprep.subr.mxu0 0.0
    %105 = vmatpush2.msra.mxu0 0.0
    %106 = vmatprep.subr.mxu0 0.0
    %107 = vmatpush2.msra.mxu0 0.0
    %108 = vmatprep.subr.mxu0 0.0
    %109 = vmatpush2.msra.mxu0 0.0
    %110 = vmatprep.subr.mxu0 0.0
    %111 = vmatpush2.msra.mxu0 0.0
    %112 = vmatprep.subr.mxu0 0.0
    %113 = vmatpush2.msra.mxu0 0.0
    %114 = vmatprep.subr.mxu0 0.0
    %115 = vmatpush2.msra.mxu0 0.0
    %116 = vmatprep.subr.mxu0 0.0
    %117 = vmatpush2.msra.mxu0 0.0
    %118 = vmatprep.subr.mxu0 0.0
    %119 = vmatpush2.msra.mxu0 0.0
    %120 = vmatprep.subr.mxu0 0.0
    %121 = vmatpush2.msra.mxu0 0.0
    %122 = vmatprep.subr.mxu0 0.0
    %123 = vmatpush2.msra.mxu0 0.0
    %124 = vmatprep.subr.mxu0 0.0
    %125 = vmatpush2.msra.mxu0 0.0
    %126 = vmatprep.subr.mxu0 0.0
    %127 = vmatpush2.msra.mxu0 0.0
    %128 = vmatprep.subr.mxu0 0.0
    %129 = vmatpush2.msra.mxu0 0.0
    %130 = vmatprep.mubr.f32.mxu0 0.0
    %131 = vmatmul.mubr.f32.gmra.mxu0 %v61
    %v132 = vpop.f32.mrf.mxu0
    %v133 = vadd.f32 %v57, %v132
    %v134 = vpop.f32.mrf.mxu0
    %135 = vmatprep.mubr.f32.mxu0 0.0
    %136 = vmatmul.mubr.f32.gmra.mxu0 %v64
    %v137 = vpop.f32.mrf.mxu0
    %v138 = vadd.f32 %v57, %v137
    %v139 = vpop.f32.mrf.mxu0
    %140 = vdwg.mxu0
    %v141 = vmax.f32 %v133, 0.0
    %v142 = vmax.f32 %v138, 0.0
    %v143 = vld [vmem:[%s3] sm:$0x1]
    %v145 = vsel %vm59, %v143, 0
    %v148 = vsel %vm59, %v141, 0
    %150 = vmatprep.subr.mxu0 0.0
    %151 = vmatpush1.xpose.msra.mxu0 0.0
    %152 = vmatprep.subr.mxu0 0.0
    %153 = vmatpush1.xpose.msra.mxu0 0.0
    %154 = vmatprep.subr.mxu0 0.0
    %155 = vmatpush1.xpose.msra.mxu0 0.0
    %156 = vmatprep.subr.mxu0 0.0
    %157 = vmatpush1.xpose.msra.mxu0 0.0
    %158 = vmatprep.subr.mxu0 0.0
    %159 = vmatpush1.xpose.msra.mxu0 0.0
    %160 = vmatprep.subr.mxu0 0.0
    %161 = vmatpush1.xpose.msra.mxu0 0.0
    %162 = vmatprep.subr.mxu0 0.0
    %163 = vmatpush1.xpose.msra.mxu0 0.0
    %164 = vmatprep.subr.mxu0 0.0
    %165 = vmatpush1.xpose.msra.mxu0 0.0
    %166 = vmatprep.subr.mxu0 0.0
    %167 = vmatpush1.xpose.msra.mxu0 0.0
    %168 = vmatprep.subr.mxu0 0.0
    %169 = vmatpush1.xpose.msra.mxu0 0.0
    %170 = vmatprep.subr.mxu0 0.0
    %171 = vmatpush1.xpose.msra.mxu0 0.0
    %172 = vmatprep.subr.mxu0 0.0
    %173 = vmatpush1.xpose.msra.mxu0 0.0
    %174 = vmatprep.subr.mxu0 0.0
    %175 = vmatpush1.xpose.msra.mxu0 0.0
    %176 = vmatprep.subr.mxu0 0.0
    %177 = vmatpush1.xpose.msra.mxu0 0.0
    %178 = vmatprep.subr.mxu0 0.0
    %179 = vmatpush1.xpose.msra.mxu0 0.0
    %180 = vmatprep.subr.mxu0 0.0
    %181 = vmatpush1.xpose.msra.mxu0 %v148
    %182 = vmatprep.subr.mxu0 0.0
    %183 = vmatpush2.xpose.msra.mxu0 0.0
    %184 = vmatprep.subr.mxu0 0.0
    %185 = vmatpush2.xpose.msra.mxu0 0.0
    %186 = vmatprep.subr.mxu0 0.0
    %187 = vmatpush2.xpose.msra.mxu0 0.0
    %188 = vmatprep.subr.mxu0 0.0
    %189 = vmatpush2.xpose.msra.mxu0 0.0
    %190 = vmatprep.subr.mxu0 0.0
    %191 = vmatpush2.xpose.msra.mxu0 0.0
    %192 = vmatprep.subr.mxu0 0.0
    %193 = vmatpush2.xpose.msra.mxu0 0.0
    %194 = vmatprep.subr.mxu0 0.0
    %195 = vmatpush2.xpose.msra.mxu0 0.0
    %196 = vmatprep.subr.mxu0 0.0
    %197 = vmatpush2.xpose.msra.mxu0 0.0
    %198 = vmatprep.subr.mxu0 0.0
    %199 = vmatpush2.xpose.msra.mxu0 0.0
    %200 = vmatprep.subr.mxu0 0.0
    %201 = vmatpush2.xpose.msra.mxu0 0.0
    %202 = vmatprep.subr.mxu0 0.0
    %203 = vmatpush2.xpose.msra.mxu0 0.0
    %204 = vmatprep.subr.mxu0 0.0
    %205 = vmatpush2.xpose.msra.mxu0 0.0
    %206 = vmatprep.subr.mxu0 0.0
    %207 = vmatpush2.xpose.msra.mxu0 0.0
    %208 = vmatprep.subr.mxu0 0.0
    %209 = vmatpush2.xpose.msra.mxu0 0.0
    %210 = vmatprep.subr.mxu0 0.0
    %211 = vmatpush2.xpose.msra.mxu0 0.0
    %212 = vmatprep.subr.mxu0 0.0
    %213 = vmatpush2.xpose.msra.mxu0 0.0
    %214 = vmatprep.mubr.f32.mxu0 0.0
    %215 = vmatmul.mubr.f32.gmra.mxu0 %v145
    %v216 = vpop.f32.mrf.mxu0
    %v217 = vadd.f32 0.0, %v216
    %v218 = vpop.f32.mrf.mxu0
    %219 = vdwg.mxu0
    %v221 = vsel %vm59, %v142, 0
    %223 = vmatprep.subr.mxu0 0.0
    %224 = vmatpush1.xpose.msra.mxu0 0.0
    %225 = vmatprep.subr.mxu0 0.0
    %226 = vmatpush1.xpose.msra.mxu0 0.0
    %227 = vmatprep.subr.mxu0 0.0
    %228 = vmatpush1.xpose.msra.mxu0 0.0
    %229 = vmatprep.subr.mxu0 0.0
    %230 = vmatpush1.xpose.msra.mxu0 0.0
    %231 = vmatprep.subr.mxu0 0.0
    %232 = vmatpush1.xpose.msra.mxu0 0.0
    %233 = vmatprep.subr.mxu0 0.0
    %234 = vmatpush1.xpose.msra.mxu0 0.0
    %235 = vmatprep.subr.mxu0 0.0
    %236 = vmatpush1.xpose.msra.mxu0 0.0
    %237 = vmatprep.subr.mxu0 0.0
    %238 = vmatpush1.xpose.msra.mxu0 0.0
    %239 = vmatprep.subr.mxu0 0.0
    %240 = vmatpush1.xpose.msra.mxu0 0.0
    %241 = vmatprep.subr.mxu0 0.0
    %242 = vmatpush1.xpose.msra.mxu0 0.0
    %243 = vmatprep.subr.mxu0 0.0
    %244 = vmatpush1.xpose.msra.mxu0 0.0
    %245 = vmatprep.subr.mxu0 0.0
    %246 = vmatpush1.xpose.msra.mxu0 0.0
    %247 = vmatprep.subr.mxu0 0.0
    %248 = vmatpush1.xpose.msra.mxu0 0.0
    %249 = vmatprep.subr.mxu0 0.0
    %250 = vmatpush1.xpose.msra.mxu0 0.0
    %251 = vmatprep.subr.mxu0 0.0
    %252 = vmatpush1.xpose.msra.mxu0 0.0
    %253 = vmatprep.subr.mxu0 0.0
    %254 = vmatpush1.xpose.msra.mxu0 %v221
    %255 = vmatprep.subr.mxu0 0.0
    %256 = vmatpush2.xpose.msra.mxu0 0.0
    %257 = vmatprep.subr.mxu0 0.0
    %258 = vmatpush2.xpose.msra.mxu0 0.0
    %259 = vmatprep.subr.mxu0 0.0
    %260 = vmatpush2.xpose.msra.mxu0 0.0
    %261 = vmatprep.subr.mxu0 0.0
    %262 = vmatpush2.xpose.msra.mxu0 0.0
    %263 = vmatprep.subr.mxu0 0.0
    %264 = vmatpush2.xpose.msra.mxu0 0.0
    %265 = vmatprep.subr.mxu0 0.0
    %266 = vmatpush2.xpose.msra.mxu0 0.0
    %267 = vmatprep.subr.mxu0 0.0
    %268 = vmatpush2.xpose.msra.mxu0 0.0
    %269 = vmatprep.subr.mxu0 0.0
    %270 = vmatpush2.xpose.msra.mxu0 0.0
    %271 = vmatprep.subr.mxu0 0.0
    %272 = vmatpush2.xpose.msra.mxu0 0.0
    %273 = vmatprep.subr.mxu0 0.0
    %274 = vmatpush2.xpose.msra.mxu0 0.0
    %275 = vmatprep.subr.mxu0 0.0
    %276 = vmatpush2.xpose.msra.mxu0 0.0
    %277 = vmatprep.subr.mxu0 0.0
    %278 = vmatpush2.xpose.msra.mxu0 0.0
    %279 = vmatprep.subr.mxu0 0.0
    %280 = vmatpush2.xpose.msra.mxu0 0.0
    %281 = vmatprep.subr.mxu0 0.0
    %282 = vmatpush2.xpose.msra.mxu0 0.0
    %283 = vmatprep.subr.mxu0 0.0
    %284 = vmatpush2.xpose.msra.mxu0 0.0
    %285 = vmatprep.subr.mxu0 0.0
    %286 = vmatpush2.xpose.msra.mxu0 0.0
    %287 = vmatprep.mubr.f32.mxu0 0.0
    %288 = vmatmul.mubr.f32.gmra.mxu0 %v145
    %v289 = vpop.f32.mrf.mxu0
    %v290 = vadd.f32 0.0, %v289
    %v291 = vpop.f32.mrf.mxu0
    %292 = vdwg.mxu0
    %vm293 = vcmask 57344
    %v294 = vsel %vm293, %v217, -inf
    %295 = vmax.xlane.f32.xlu0 %v294
    %v296 = vpop.xlane.xlu0 %295
    %v297 = vsel %vm293, %v290, -inf
    %298 = vmax.xlane.f32.xlu0 %v297
    %v299 = vpop.xlane.xlu0 %298
    %v300 = vsub.f32 %v217, %v296
    %v301 = vsub.f32 %v290, %v299
    %v302 = vmul.f32 %v300, 1.442695
    %v303 = vpow.pop %v302
    %v304 = vmul.f32 %v301, 1.442695
    %v305 = vpow.pop %v304
    %v306 = vsel %vm293, %v303, 0.0
    %307 = vadd.xlane.f32.xlu0 %v306
    %v308 = vpop.xlane.xlu0 %307
    %v309 = vsel %vm293, %v305, 0.0
    %310 = vadd.xlane.f32.xlu0 %v309
    %v311 = vpop.xlane.xlu0 %310
    %v312 = vrcp.pop %v308
    %v313 = vmul.f32 %v303, %v312
    %v314 = vrcp.pop %v311
    %v315 = vmul.f32 %v305, %v314
    %vm316 = vcmask 64512
    %v318 = vsel %vm316, %v313, 0
    %320 = vmatprep.subr.mxu0 0.0
    %321 = vmatpush1.msra.mxu0 0.0
    %322 = vmatprep.subr.mxu0 0.0
    %323 = vmatpush1.msra.mxu0 0.0
    %324 = vmatprep.subr.mxu0 0.0
    %325 = vmatpush1.msra.mxu0 0.0
    %326 = vmatprep.subr.mxu0 0.0
    %327 = vmatpush1.msra.mxu0 0.0
    %328 = vmatprep.subr.mxu0 0.0
    %329 = vmatpush1.msra.mxu0 0.0
    %330 = vmatprep.subr.mxu0 0.0
    %331 = vmatpush1.msra.mxu0 0.0
    %332 = vmatprep.subr.mxu0 0.0
    %333 = vmatpush1.msra.mxu0 0.0
    %334 = vmatprep.subr.mxu0 0.0
    %335 = vmatpush1.msra.mxu0 0.0
    %336 = vmatprep.subr.mxu0 0.0
    %337 = vmatpush1.msra.mxu0 0.0
    %338 = vmatprep.subr.mxu0 0.0
    %339 = vmatpush1.msra.mxu0 0.0
    %340 = vmatprep.subr.mxu0 0.0
    %341 = vmatpush1.msra.mxu0 0.0
    %342 = vmatprep.subr.mxu0 0.0
    %343 = vmatpush1.msra.mxu0 0.0
    %344 = vmatprep.subr.mxu0 0.0
    %345 = vmatpush1.msra.mxu0 0.0
    %346 = vmatprep.subr.mxu0 0.0
    %347 = vmatpush1.msra.mxu0 0.0
    %348 = vmatprep.subr.mxu0 0.0
    %349 = vmatpush1.msra.mxu0 0.0
    %350 = vmatprep.subr.mxu0 0.0
    %351 = vmatpush1.msra.mxu0 %v46
    %352 = vmatprep.subr.mxu0 0.0
    %353 = vmatpush2.msra.mxu0 0.0
    %354 = vmatprep.subr.mxu0 0.0
    %355 = vmatpush2.msra.mxu0 0.0
    %356 = vmatprep.subr.mxu0 0.0
    %357 = vmatpush2.msra.mxu0 0.0
    %358 = vmatprep.subr.mxu0 0.0
    %359 = vmatpush2.msra.mxu0 0.0
    %360 = vmatprep.subr.mxu0 0.0
    %361 = vmatpush2.msra.mxu0 0.0
    %362 = vmatprep.subr.mxu0 0.0
    %363 = vmatpush2.msra.mxu0 0.0
    %364 = vmatprep.subr.mxu0 0.0
    %365 = vmatpush2.msra.mxu0 0.0
    %366 = vmatprep.subr.mxu0 0.0
    %367 = vmatpush2.msra.mxu0 0.0
    %368 = vmatprep.subr.mxu0 0.0
    %369 = vmatpush2.msra.mxu0 0.0
    %370 = vmatprep.subr.mxu0 0.0
    %371 = vmatpush2.msra.mxu0 0.0
    %372 = vmatprep.subr.mxu0 0.0
    %373 = vmatpush2.msra.mxu0 0.0
    %374 = vmatprep.subr.mxu0 0.0
    %375 = vmatpush2.msra.mxu0 0.0
    %376 = vmatprep.subr.mxu0 0.0
    %377 = vmatpush2.msra.mxu0 0.0
    %378 = vmatprep.subr.mxu0 0.0
    %379 = vmatpush2.msra.mxu0 0.0
    %380 = vmatprep.subr.mxu0 0.0
    %381 = vmatpush2.msra.mxu0 0.0
    %382 = vmatprep.subr.mxu0 0.0
    %383 = vmatpush2.msra.mxu0 0.0
    %384 = vmatprep.mubr.f32.mxu0 0.0
    %385 = vmatmul.mubr.f32.gmra.mxu0 %v318
    %v386 = vpop.f32.mrf.mxu0
    %v387 = vadd.f32 0.0, %v386
    %v388 = vpop.f32.mrf.mxu0
    %389 = vdwg.mxu0
    %v391 = vsel %vm316, %v315, 0
    %393 = vmatprep.subr.mxu0 0.0
    %394 = vmatpush1.msra.mxu0 0.0
    %395 = vmatprep.subr.mxu0 0.0
    %396 = vmatpush1.msra.mxu0 0.0
    %397 = vmatprep.subr.mxu0 0.0
    %398 = vmatpush1.msra.mxu0 0.0
    %399 = vmatprep.subr.mxu0 0.0
    %400 = vmatpush1.msra.mxu0 0.0
    %401 = vmatprep.subr.mxu0 0.0
    %402 = vmatpush1.msra.mxu0 0.0
    %403 = vmatprep.subr.mxu0 0.0
    %404 = vmatpush1.msra.mxu0 0.0
    %405 = vmatprep.subr.mxu0 0.0
    %406 = vmatpush1.msra.mxu0 0.0
    %407 = vmatprep.subr.mxu0 0.0
    %408 = vmatpush1.msra.mxu0 0.0
    %409 = vmatprep.subr.mxu0 0.0
    %410 = vmatpush1.msra.mxu0 0.0
    %411 = vmatprep.subr.mxu0 0.0
    %412 = vmatpush1.msra.mxu0 0.0
    %413 = vmatprep.subr.mxu0 0.0
    %414 = vmatpush1.msra.mxu0 0.0
    %415 = vmatprep.subr.mxu0 0.0
    %416 = vmatpush1.msra.mxu0 0.0
    %417 = vmatprep.subr.mxu0 0.0
    %418 = vmatpush1.msra.mxu0 0.0
    %419 = vmatprep.subr.mxu0 0.0
    %420 = vmatpush1.msra.mxu0 0.0
    %421 = vmatprep.subr.mxu0 0.0
    %422 = vmatpush1.msra.mxu0 0.0
    %423 = vmatprep.subr.mxu0 0.0
    %424 = vmatpush1.msra.mxu0 %v47
    %425 = vmatprep.subr.mxu0 0.0
    %426 = vmatpush2.msra.mxu0 0.0
    %427 = vmatprep.subr.mxu0 0.0
    %428 = vmatpush2.msra.mxu0 0.0
    %429 = vmatprep.subr.mxu0 0.0
    %430 = vmatpush2.msra.mxu0 0.0
    %431 = vmatprep.subr.mxu0 0.0
    %432 = vmatpush2.msra.mxu0 0.0
    %433 = vmatprep.subr.mxu0 0.0
    %434 = vmatpush2.msra.mxu0 0.0
    %435 = vmatprep.subr.mxu0 0.0
    %436 = vmatpush2.msra.mxu0 0.0
    %437 = vmatprep.subr.mxu0 0.0
    %438 = vmatpush2.msra.mxu0 0.0
    %439 = vmatprep.subr.mxu0 0.0
    %440 = vmatpush2.msra.mxu0 0.0
    %441 = vmatprep.subr.mxu0 0.0
    %442 = vmatpush2.msra.mxu0 0.0
    %443 = vmatprep.subr.mxu0 0.0
    %444 = vmatpush2.msra.mxu0 0.0
    %445 = vmatprep.subr.mxu0 0.0
    %446 = vmatpush2.msra.mxu0 0.0
    %447 = vmatprep.subr.mxu0 0.0
    %448 = vmatpush2.msra.mxu0 0.0
    %449 = vmatprep.subr.mxu0 0.0
    %450 = vmatpush2.msra.mxu0 0.0
    %451 = vmatprep.subr.mxu0 0.0
    %452 = vmatpush2.msra.mxu0 0.0
    %453 = vmatprep.subr.mxu0 0.0
    %454 = vmatpush2.msra.mxu0 0.0
    %455 = vmatprep.subr.mxu0 0.0
    %456 = vmatpush2.msra.mxu0 0.0
    %457 = vmatprep.mubr.f32.mxu0 0.0
    %458 = vmatmul.mubr.f32.gmra.mxu0 %v391
    %v459 = vpop.f32.mrf.mxu0
    %v460 = vadd.f32 0.0, %v459
    %v461 = vpop.f32.mrf.mxu0
    %462 = vdwg.mxu0
    %vm463 = vcmask 253952
    %464 = vst.msk [vmem:[#allocation7] sm:$0x1] %vm463, %v387
    %465 = vst.msk [vmem:[#allocation7 + $0x1] sm:$0x1] %vm463, %v460
    // Predicated region
    $region26: #{tpu_custom_call.1} parent=1 // pred_check
      _
    $region27: #{tpu_custom_call.1} parent=1 // pred_check_branch
      %467 = sbr.rel (0) target = $region29
    $region28: #{tpu_custom_call.1} parent=1 // pred_region
      %s469 = ssub.s32 32, 32
      %470 = vsyncadd [#allocation4], %s469
      %s471 = sshll.u32 [#allocation7], 4
      %s472 = int_to_ptr.vmem [resolvable:$true] %s471
      %477 = dma.vmem_to_hbm [thread:$0]  %s472, 32, %s4, [#allocation4], 16, 16, 1
    $region29: #{tpu_custom_call.1} parent=1 // pred_fallthru
      _
    // Predicated region
    $region30: #{tpu_custom_call.1} parent=1 // pred_check
      _
    $region31: #{tpu_custom_call.1} parent=1 // pred_check_branch
      %479 = sbr.rel (0) target = $region33
    $region32: #{tpu_custom_call.1} parent=1 // pred_region
      %480 = dma.done [#allocation4], 32
    $region33: #{tpu_custom_call.1} parent=1 // pred_fallthru
      _
    %481 = vsyncpa [#allocation3], 1
    %482 = vsyncpa [#allocation6], 1
    %483 = vsyncpa [#allocation4], 1

</llo_original>
